<compile_context>
chip_gen: v7x
topology: tpu7x:2x2x1
jax: 0.10.0
libtpu: 0.0.40
codegen_flags: <defaults>
</compile_context>

<pallas_src>
import math

import jax
import jax.numpy as jnp
from jax.experimental import pallas as pl
from jax.experimental.pallas import tpu as pltpu


# ----------------------------------------------------------------------------
# Pallas kernel
# ----------------------------------------------------------------------------
def pos_enc_kernel(x_ref, pe_ref, o_ref):
    # x_ref, pe_ref, o_ref: (S, E) — one batch element per grid step.
    o_ref[...] = x_ref[...] + pe_ref[...]


# ----------------------------------------------------------------------------
# Init-time buffer (register_buffer equivalent)
# ----------------------------------------------------------------------------
def make_positional_encoding_table(embed_dim, max_len=5000, dtype=jnp.float32):
    """pe[p, 2i] = sin(p * w_i), pe[p, 2i+1] = cos(p * w_i)."""
    position = jnp.arange(max_len, dtype=jnp.float32)[:, None]            # (L, 1)
    div_term = jnp.exp(
        jnp.arange(0, embed_dim, 2, dtype=jnp.float32)
        * -(math.log(10000.0) / embed_dim))                               # (E/2,)
    angles = position * div_term                                          # (L, E/2)
    # Interleave: [..., sin_i, cos_i, ...] == pe[:,0::2]=sin, pe[:,1::2]=cos.
    pe = jnp.stack([jnp.sin(angles), jnp.cos(angles)], axis=-1)
    return pe.reshape(max_len, embed_dim).astype(dtype)


# ----------------------------------------------------------------------------
# Forward wrapper (matches PositionalEncoding.forward)
# ----------------------------------------------------------------------------
def positional_encoding_forward(x, pe):
    """x: (B, S, E); pe: (max_len, E) precomputed buffer -> (B, S, E)."""
    B, S, E = x.shape
    pe_s = pe[:S]  # static slice at trace time (== self.pe[:, :seq_len])

    return pl.pallas_call(
        pos_enc_kernel,
        out_shape=jax.ShapeDtypeStruct((B, S, E), x.dtype),
        grid=(B,),
        in_specs=[
            # One batch element per grid step; kernel sees (S, E).
            pl.BlockSpec((pl.Squeezed(), S, E), lambda b: (b, 0, 0)),
            # pe is broadcast over batch purely via the index_map (no jnp.tile).
            pl.BlockSpec((S, E), lambda b: (0, 0)),
        ],
        out_specs=pl.BlockSpec((pl.Squeezed(), S, E), lambda b: (b, 0, 0)),
        compiler_params=pltpu.CompilerParams(
            dimension_semantics=("parallel",)),
    )(x, pe_s)


# ----------------------------------------------------------------------------
# Pure-JAX reference for sanity check
# ----------------------------------------------------------------------------
def reference(x, pe):
    S = x.shape[1]
    return x + pe[None, :S, :]


# ----------------------------------------------------------------------------
if __name__ == "__main__":
    embed_dim = 512
    batch, seq = 2, 64
    max_len = 256  # module default is 5000; smaller buffer for the demo

    key = jax.random.PRNGKey(0)
    x = jax.random.normal(key, (batch, seq, embed_dim), jnp.float32)

    pe = make_positional_encoding_table(embed_dim, max_len)  # init-time buffer

    out = jax.block_until_ready(positional_encoding_forward(x, pe))
    ref = jax.block_until_ready(reference(x, pe))

    assert out.shape == (batch, seq, embed_dim)
    assert jnp.allclose(out, ref, atol=1e-6, rtol=1e-6), "mismatch vs reference"
    print("KERNEL_OK")
</pallas_src>

<mosaic_0001>
module attributes {stable_mosaic.version = 11 : i64} {
  func.func @pos_enc_kernel(%arg0: i32, %arg1: memref<1x64x512xf32, #tpu.memory_space<vmem>>, %arg2: memref<64x512xf32, #tpu.memory_space<vmem>>, %arg3: memref<1x64x512xf32, #tpu.memory_space<vmem>>) attributes {dimension_semantics = [#tpu.dimension_semantics<parallel>], iteration_bounds = array<i64: 2>, scalar_prefetch = 0 : i64, scratch_operands = 0 : i64, tpu.core_type = #tpu.core_type<tc>, window_params = [{transform_indices = @transform_0, window_bounds = array<i64: 1, 64, 512>}, {pipeline_mode = #tpu.pipeline_mode<synchronous>, transform_indices = @transform_1, window_bounds = array<i64: 64, 512>}, {transform_indices = @transform_2, window_bounds = array<i64: 1, 64, 512>}]} {
    %c0 = arith.constant 0 : index
    %c0_0 = arith.constant 0 : index
    %c0_1 = arith.constant 0 : index
    %0 = vector.load %arg1[%c0, %c0_0, %c0_1] : memref<1x64x512xf32, #tpu.memory_space<vmem>>, vector<1x64x512xf32>
    %1 = vector.shape_cast %0 : vector<1x64x512xf32> to vector<64x512xf32>
    %c0_2 = arith.constant 0 : index
    %c0_3 = arith.constant 0 : index
    %2 = vector.load %arg2[%c0_2, %c0_3] : memref<64x512xf32, #tpu.memory_space<vmem>>, vector<64x512xf32>
    %3 = arith.addf %1, %2 : vector<64x512xf32>
    %c0_4 = arith.constant 0 : index
    %c0_5 = arith.constant 0 : index
    %c0_6 = arith.constant 0 : index
    %4 = vector.load %arg3[%c0_4, %c0_5, %c0_6] : memref<1x64x512xf32, #tpu.memory_space<vmem>>, vector<1x64x512xf32>
    %5 = vector.shape_cast %4 : vector<1x64x512xf32> to vector<64x512xf32>
    %6 = vector.shape_cast %3 : vector<64x512xf32> to vector<1x64x512xf32>
    tpu.vector_store %arg3[%c0_4, %c0_5, %c0_6], %6 {strides = array<i32>} : memref<1x64x512xf32, #tpu.memory_space<vmem>>, vector<1x64x512xf32>,
    return
  }
  func.func @transform_0(%arg0: i32) -> (i32, i32, i32) {
    %c0_i32 = arith.constant 0 : i32
    %c0_i32_0 = arith.constant 0 : i32
    %c0_i32_1 = arith.constant 0 : i32
    return %arg0, %c0_i32, %c0_i32_0 : i32, i32, i32
  }
  func.func @transform_1(%arg0: i32) -> (i32, i32) {
    %c0_i32 = arith.constant 0 : i32
    %c0_i32_0 = arith.constant 0 : i32
    %c0_i32_1 = arith.constant 0 : i32
    return %c0_i32, %c0_i32_0 : i32, i32
  }
  func.func @transform_2(%arg0: i32) -> (i32, i32, i32) {
    %c0_i32 = arith.constant 0 : i32
    %c0_i32_0 = arith.constant 0 : i32
    %c0_i32_1 = arith.constant 0 : i32
    return %arg0, %c0_i32, %c0_i32_0 : i32, i32, i32
  }
}

</mosaic_0001>

<llo_original>
// kernel: tpu_custom_call.1
$region0: #{tpu_custom_call.1}
  #allocation0 [shape = 'u32[]', space=smem, size = 0x4, offset = 0x4, fixed_abs, tag = 'smem constant byte address 0x4 - core index']
  #allocation1 [shape = 'u32[144,128]{1,0:T(1,128)}', space=vmem, size = 0x12000, scoped, tag = 'internal scratch']
  %s0 = inlined_call_operand.hbm [shape: f32[2,64,512], index: 0, kind: input, shape index: {}]
  %s1 = inlined_call_operand.hbm [shape: f32[64,512], index: 1, kind: input, shape index: {}]
  %s2 = inlined_call_operand.hbm [shape: f32[2,64,512], index: 2, kind: output, shape index: {}]
  %s3 = sld [smem:[#allocation0]]
  $region49: #{tpu_custom_call.1} parent=0
    _
  %s5 = ssub.s32 1, %s3
  %s6 = scalar_select 0, %s5, %s3
  $region1: #{tpu_custom_call.1} parent=0
    #allocation2 [shape = 'u8[262144]{0}', space=vmem, size = 0x40000, scoped, tag = 'input window, operand 0']
    #allocation3 [shape = 's32[2]{0}', space=sflag, size = 0x8, scoped, tag = 'scoped memory for tpu_custom_call.1']
    #allocation4 [shape = 's32[2]{0}', space=sflag, size = 0x8, scoped, tag = 'scoped memory for tpu_custom_call.1']
    #allocation5 [shape = 'u8[131072]{0}', space=vmem, size = 0x20000, scoped, tag = 'input window, operand 1, single buffered']
    #allocation6 [shape = 's32[1]{0}', space=sflag, size = 0x4, scoped, tag = 'scoped memory for tpu_custom_call.1']
    #allocation7 [shape = 'u8[262144]{0}', space=vmem, size = 0x40000, scoped, tag = 'output window, operand 0']
    %7 = vsyncpa [#allocation3], 0
    %s8 = scalar_lea.sflag [#allocation3], 1
    %9 = vsyncpa %s8, 0
    %10 = vsyncpa [#allocation6], 0
    %11 = vsyncpa [#allocation4], 0
    %s12 = scalar_lea.sflag [#allocation4], 1
    %13 = vsyncpa %s12, 0
    loop: start=0, step=1, limit=4
    $region2: #{tpu_custom_call.1} parent=1 // loop_pre_header
      _
    $region3: #{tpu_custom_call.1} parent=1 // loop_header
      %s15 = sphi 0, %s19
      %p16 = scmp.ge.s32.totalorder %s15, 4
      %s25 = sphi 0, %s27
      %s28 = sphi 0, %s25
      %s29 = sphi 0, %s28
      %s45 = sphi 0, %s29
      %s49 = sphi 0, %s49
      %s51 = sphi 0, %s49
      %s52 = sphi 0, %s51
      %s66 = sphi 0, %s52
      %s72 = sphi 0, %s74
      %s75 = sphi 0, %s72
      %s76 = sphi 0, %s75
      %s92 = sphi 0, %s76
    $region4: #{tpu_custom_call.1} parent=1 // loop_header_branch
      %18 = sbr.rel (%p16) target = $region8
    $region5: #{tpu_custom_call.1} parent=1 // loop_body
      %s20 = ssub.s32 %s15, 1
      %s21 = ssub.s32 %s15, 2
      %s22 = sadd.s32 %s15, 1
      %s23 = ssub.s32 %s15, %s22
      %p24 = scmp.eq.s32.totalorder %s23, 0
      %s26 = sadd.s32 %s25, 1
      %s27 = scalar_select %p24, %s25, %s26
      %p30 = pneg %p24
      %p31 = scmp.eq.s32.totalorder %s15, 1
      %p32 = por %p30, %p31
      %p33 = scmp.ne.s32.totalorder %s25, %s28
      %p34 = scmp.eq.s32.totalorder %s15, 0
      %p35 = por %p33, %p34
      %p36 = scmp.ne.s32.totalorder %s25, %s28
      %p37 = scmp.eq.s32.totalorder %s20, 1
      %p38 = por %p36, %p37
      %p39 = scmp.ne.s32.totalorder %s28, %s29
      %p40 = scmp.eq.s32.totalorder %s20, 0
      %p41 = por %p39, %p40
      %p42 = scmp.ne.s32.totalorder %s28, %s29
      %p43 = scmp.eq.s32.totalorder %s21, 1
      %p44 = por %p42, %p43
      %p46 = scmp.ne.s32.totalorder %s29, %s45
      %p47 = scmp.eq.s32.totalorder %s21, 0
      %p48 = por %p46, %p47
      %s50 = sadd.s32 %s49, 1
      %p53 = scmp.eq.s32.totalorder %s15, 1
      %p54 = scmp.ne.s32.totalorder %s49, %s51
      %p55 = scmp.eq.s32.totalorder %s15, 0
      %p56 = por %p54, %p55
      %p57 = scmp.ne.s32.totalorder %s49, %s51
      %p58 = scmp.eq.s32.totalorder %s20, 1
      %p59 = por %p57, %p58
      %p60 = scmp.ne.s32.totalorder %s51, %s52
      %p61 = scmp.eq.s32.totalorder %s20, 0
      %p62 = por %p60, %p61
      %p63 = scmp.ne.s32.totalorder %s51, %s52
      %p64 = scmp.eq.s32.totalorder %s21, 1
      %p65 = por %p63, %p64
      %p67 = scmp.ne.s32.totalorder %s52, %s66
      %p68 = scmp.eq.s32.totalorder %s21, 0
      %p69 = por %p67, %p68
      %s70 = ssub.s32 %s15, %s22
      %p71 = scmp.eq.s32.totalorder %s70, 0
      %s73 = sadd.s32 %s72, 1
      %s74 = scalar_select %p71, %s72, %s73
      %p77 = pneg %p71
      %p78 = scmp.eq.s32.totalorder %s15, 1
      %p79 = por %p77, %p78
      %p80 = scmp.ne.s32.totalorder %s72, %s75
      %p81 = scmp.eq.s32.totalorder %s15, 0
      %p82 = por %p80, %p81
      %p83 = scmp.ne.s32.totalorder %s72, %s75
      %p84 = scmp.eq.s32.totalorder %s20, 1
      %p85 = por %p83, %p84
      %p86 = scmp.ne.s32.totalorder %s75, %s76
      %p87 = scmp.eq.s32.totalorder %s20, 0
      %p88 = por %p86, %p87
      %p89 = scmp.ne.s32.totalorder %s75, %s76
      %p90 = scmp.eq.s32.totalorder %s21, 1
      %p91 = por %p89, %p90
      %p93 = scmp.ne.s32.totalorder %s76, %s92
      %p94 = scmp.eq.s32.totalorder %s21, 0
      %p95 = por %p93, %p94
      %p96 = scmp.le.s32.totalorder 1, %s15
      %p97 = scmp.lt.s32.totalorder %s15, 3
      %p98 = pnand %p96, %p97
      %p99 = pneg %p98
      // Predicated region
      $region9: #{tpu_custom_call.1} parent=5 // pred_check
        _
      $region10: #{tpu_custom_call.1} parent=5 // pred_check_branch
        %101 = sbr.rel (%p98) target = $region12
      $region11: #{tpu_custom_call.1} parent=5 // pred_region
        %s102 = ssub.s32 %s15, 1
        // Predicated region
        $region13: #{tpu_custom_call.1} parent=11 // pred_check
          %p103 = pneg %p62
        $region14: #{tpu_custom_call.1} parent=11 // pred_check_branch
          %105 = sbr.rel (%p103) target = $region16
        $region15: #{tpu_custom_call.1} parent=11 // pred_region
          %s107 = ssub.s32 4096, 4096
          %108 = vsyncadd [#allocation6], %s107
          %s109 = sshll.u32 [#allocation5], 4
          %s110 = int_to_ptr.vmem [resolvable:$true] %s109
          %115 = dma.hbm_to_vmem [thread:$0]  %s1, 4096, %s110, [#allocation6], 512, 512, 32
        $region16: #{tpu_custom_call.1} parent=11 // pred_fallthru
          _
      $region12: #{tpu_custom_call.1} parent=5 // pred_fallthru
        _
      %p116 = scmp.lt.s32.totalorder %s15, 2
      // Predicated region
      $region17: #{tpu_custom_call.1} parent=5 // pred_check
        %p117 = pneg %p116
      $region18: #{tpu_custom_call.1} parent=5 // pred_check_branch
        %119 = sbr.rel (%p117) target = $region20
      $region19: #{tpu_custom_call.1} parent=5 // pred_region
        // Predicated region
        $region21: #{tpu_custom_call.1} parent=19 // pred_check
          %p120 = pneg %p35
        $region22: #{tpu_custom_call.1} parent=19 // pred_check_branch
          %122 = sbr.rel (%p120) target = $region24
        $region23: #{tpu_custom_call.1} parent=19 // pred_region
          %s123 = sand.u32 %s25, 1
          %s124 = scalar_lea.sflag [#allocation3], %s123
          %s125 = sand.u32 %s25, 1
          %s126 = smul.addr %s125, 256
          %s127 = scalar_lea.vmem [#allocation2], %s126
          %s129 = ssub.s32 4096, 4096
          %130 = vsyncadd %s124, %s129
          %s131 = smul.addr %s15, 32
          %s132 = smul.addr %s131, 128
          %s133 = scalar_lea.hbm %s0, %s132
          %s134 = sshll.u32 %s127, 4
          %s135 = int_to_ptr.vmem [resolvable:$true] %s134
          %140 = dma.hbm_to_vmem [thread:$0]  %s133, 4096, %s135, %s124, 512, 512, 32
        $region24: #{tpu_custom_call.1} parent=19 // pred_fallthru
          _
      $region20: #{tpu_custom_call.1} parent=5 // pred_fallthru
        _
      %p141 = scmp.le.s32.totalorder 1, %s15
      %p142 = scmp.lt.s32.totalorder %s15, 3
      %p143 = pnand %p141, %p142
      %p144 = pneg %p143
      // Predicated region
      $region25: #{tpu_custom_call.1} parent=5 // pred_check
        _
      $region26: #{tpu_custom_call.1} parent=5 // pred_check_branch
        %146 = sbr.rel (%p143) target = $region28
      $region27: #{tpu_custom_call.1} parent=5 // pred_region
        %s147 = ssub.s32 %s15, 1
        %s148 = sand.u32 %s28, 1
        %s149 = scalar_lea.sflag [#allocation3], %s148
        %s150 = sand.u32 %s28, 1
        %s151 = smul.addr %s150, 256
        %s152 = scalar_lea.vmem [#allocation2], %s151
        // Predicated region
        $region29: #{tpu_custom_call.1} parent=27 // pred_check
          %p153 = pneg %p41
        $region30: #{tpu_custom_call.1} parent=27 // pred_check_branch
          %155 = sbr.rel (%p153) target = $region32
        $region31: #{tpu_custom_call.1} parent=27 // pred_region
          %156 = dma.done %s149, 4096
        $region32: #{tpu_custom_call.1} parent=27 // pred_fallthru
          _
        // Predicated region
        $region33: #{tpu_custom_call.1} parent=27 // pred_check
          %p157 = pneg %p62
        $region34: #{tpu_custom_call.1} parent=27 // pred_check_branch
          %159 = sbr.rel (%p157) target = $region36
        $region35: #{tpu_custom_call.1} parent=27 // pred_region
          %160 = dma.done [#allocation6], 4096
        $region36: #{tpu_custom_call.1} parent=27 // pred_fallthru
          _
        %s161 = sand.u32 %s28, 1
        %s162 = scalar_lea.sflag [#allocation3], %s161
        %s163 = sand.u32 %s28, 1
        %s164 = smul.addr %s163, 256
        %s165 = scalar_lea.vmem [#allocation2], %s164
        %p166 = pneg %p41
        %p167 = pneg %p38
        %p168 = pneg %p62
        %p169 = pneg %p59
        %p170 = pneg %p88
        %p171 = pneg %p85
        %s172 = sand.u32 %s75, 1
        %s173 = scalar_lea.sflag [#allocation4], %s172
        %s174 = sand.u32 %s75, 1
        %s175 = smul.addr %s174, 256
        %s176 = scalar_lea.vmem [#allocation7], %s175
        %v177 = vld [vmem:[%s152] sm:$0xff]
        %v178 = vld [vmem:[%s152 + $0x8] sm:$0xff]
        %v179 = vld [vmem:[%s152 + $0x10] sm:$0xff]
        %v180 = vld [vmem:[%s152 + $0x18] sm:$0xff]
        %v181 = vld [vmem:[%s152 + $0x20] sm:$0xff]
        %v182 = vld [vmem:[%s152 + $0x28] sm:$0xff]
        %v183 = vld [vmem:[%s152 + $0x30] sm:$0xff]
        %v184 = vld [vmem:[%s152 + $0x38] sm:$0xff]
        %v185 = vld [vmem:[%s152 + $0x40] sm:$0xff]
        %v186 = vld [vmem:[%s152 + $0x48] sm:$0xff]
        %v187 = vld [vmem:[%s152 + $0x50] sm:$0xff]
        %v188 = vld [vmem:[%s152 + $0x58] sm:$0xff]
        %v189 = vld [vmem:[%s152 + $0x60] sm:$0xff]
        %v190 = vld [vmem:[%s152 + $0x68] sm:$0xff]
        %v191 = vld [vmem:[%s152 + $0x70] sm:$0xff]
        %v192 = vld [vmem:[%s152 + $0x78] sm:$0xff]
        %v193 = vld [vmem:[%s152 + $0x80] sm:$0xff]
        %v194 = vld [vmem:[%s152 + $0x88] sm:$0xff]
        %v195 = vld [vmem:[%s152 + $0x90] sm:$0xff]
        %v196 = vld [vmem:[%s152 + $0x98] sm:$0xff]
        %v197 = vld [vmem:[%s152 + $0xa0] sm:$0xff]
        %v198 = vld [vmem:[%s152 + $0xa8] sm:$0xff]
        %v199 = vld [vmem:[%s152 + $0xb0] sm:$0xff]
        %v200 = vld [vmem:[%s152 + $0xb8] sm:$0xff]
        %v201 = vld [vmem:[%s152 + $0xc0] sm:$0xff]
        %v202 = vld [vmem:[%s152 + $0xc8] sm:$0xff]
        %v203 = vld [vmem:[%s152 + $0xd0] sm:$0xff]
        %v204 = vld [vmem:[%s152 + $0xd8] sm:$0xff]
        %v205 = vld [vmem:[%s152 + $0xe0] sm:$0xff]
        %v206 = vld [vmem:[%s152 + $0xe8] sm:$0xff]
        %v207 = vld [vmem:[%s152 + $0xf0] sm:$0xff]
        %v208 = vld [vmem:[%s152 + $0xf8] sm:$0xff]
        %v209 = vld [vmem:[#allocation5] sm:$0xff]
        %v210 = vld [vmem:[#allocation5 + $0x8] sm:$0xff]
        %v211 = vld [vmem:[#allocation5 + $0x10] sm:$0xff]
        %v212 = vld [vmem:[#allocation5 + $0x18] sm:$0xff]
        %v213 = vld [vmem:[#allocation5 + $0x20] sm:$0xff]
        %v214 = vld [vmem:[#allocation5 + $0x28] sm:$0xff]
        %v215 = vld [vmem:[#allocation5 + $0x30] sm:$0xff]
        %v216 = vld [vmem:[#allocation5 + $0x38] sm:$0xff]
        %v217 = vld [vmem:[#allocation5 + $0x40] sm:$0xff]
        %v218 = vld [vmem:[#allocation5 + $0x48] sm:$0xff]
        %v219 = vld [vmem:[#allocation5 + $0x50] sm:$0xff]
        %v220 = vld [vmem:[#allocation5 + $0x58] sm:$0xff]
        %v221 = vld [vmem:[#allocation5 + $0x60] sm:$0xff]
        %v222 = vld [vmem:[#allocation5 + $0x68] sm:$0xff]
        %v223 = vld [vmem:[#allocation5 + $0x70] sm:$0xff]
        %v224 = vld [vmem:[#allocation5 + $0x78] sm:$0xff]
        %v225 = vld [vmem:[#allocation5 + $0x80] sm:$0xff]
        %v226 = vld [vmem:[#allocation5 + $0x88] sm:$0xff]
        %v227 = vld [vmem:[#allocation5 + $0x90] sm:$0xff]
        %v228 = vld [vmem:[#allocation5 + $0x98] sm:$0xff]
        %v229 = vld [vmem:[#allocation5 + $0xa0] sm:$0xff]
        %v230 = vld [vmem:[#allocation5 + $0xa8] sm:$0xff]
        %v231 = vld [vmem:[#allocation5 + $0xb0] sm:$0xff]
        %v232 = vld [vmem:[#allocation5 + $0xb8] sm:$0xff]
        %v233 = vld [vmem:[#allocation5 + $0xc0] sm:$0xff]
        %v234 = vld [vmem:[#allocation5 + $0xc8] sm:$0xff]
        %v235 = vld [vmem:[#allocation5 + $0xd0] sm:$0xff]
        %v236 = vld [vmem:[#allocation5 + $0xd8] sm:$0xff]
        %v237 = vld [vmem:[#allocation5 + $0xe0] sm:$0xff]
        %v238 = vld [vmem:[#allocation5 + $0xe8] sm:$0xff]
        %v239 = vld [vmem:[#allocation5 + $0xf0] sm:$0xff]
        %v240 = vld [vmem:[#allocation5 + $0xf8] sm:$0xff]
        %v241 = vadd.f32 %v177, %v209
        %v242 = vadd.f32 %v178, %v210
        %v243 = vadd.f32 %v179, %v211
        %v244 = vadd.f32 %v180, %v212
        %v245 = vadd.f32 %v181, %v213
        %v246 = vadd.f32 %v182, %v214
        %v247 = vadd.f32 %v183, %v215
        %v248 = vadd.f32 %v184, %v216
        %v249 = vadd.f32 %v185, %v217
        %v250 = vadd.f32 %v186, %v218
        %v251 = vadd.f32 %v187, %v219
        %v252 = vadd.f32 %v188, %v220
        %v253 = vadd.f32 %v189, %v221
        %v254 = vadd.f32 %v190, %v222
        %v255 = vadd.f32 %v191, %v223
        %v256 = vadd.f32 %v192, %v224
        %v257 = vadd.f32 %v193, %v225
        %v258 = vadd.f32 %v194, %v226
        %v259 = vadd.f32 %v195, %v227
        %v260 = vadd.f32 %v196, %v228
        %v261 = vadd.f32 %v197, %v229
        %v262 = vadd.f32 %v198, %v230
        %v263 = vadd.f32 %v199, %v231
        %v264 = vadd.f32 %v200, %v232
        %v265 = vadd.f32 %v201, %v233
        %v266 = vadd.f32 %v202, %v234
        %v267 = vadd.f32 %v203, %v235
        %v268 = vadd.f32 %v204, %v236
        %v269 = vadd.f32 %v205, %v237
        %v270 = vadd.f32 %v206, %v238
        %v271 = vadd.f32 %v207, %v239
        %v272 = vadd.f32 %v208, %v240
        %273 = vst [vmem:[%s176] sm:$0xff] %v241
        %274 = vst [vmem:[%s176 + $0x8] sm:$0xff] %v242
        %275 = vst [vmem:[%s176 + $0x10] sm:$0xff] %v243
        %276 = vst [vmem:[%s176 + $0x18] sm:$0xff] %v244
        %277 = vst [vmem:[%s176 + $0x20] sm:$0xff] %v245
        %278 = vst [vmem:[%s176 + $0x28] sm:$0xff] %v246
        %279 = vst [vmem:[%s176 + $0x30] sm:$0xff] %v247
        %280 = vst [vmem:[%s176 + $0x38] sm:$0xff] %v248
        %281 = vst [vmem:[%s176 + $0x40] sm:$0xff] %v249
        %282 = vst [vmem:[%s176 + $0x48] sm:$0xff] %v250
        %283 = vst [vmem:[%s176 + $0x50] sm:$0xff] %v251
        %284 = vst [vmem:[%s176 + $0x58] sm:$0xff] %v252
        %285 = vst [vmem:[%s176 + $0x60] sm:$0xff] %v253
        %286 = vst [vmem:[%s176 + $0x68] sm:$0xff] %v254
        %287 = vst [vmem:[%s176 + $0x70] sm:$0xff] %v255
        %288 = vst [vmem:[%s176 + $0x78] sm:$0xff] %v256
        %289 = vst [vmem:[%s176 + $0x80] sm:$0xff] %v257
        %290 = vst [vmem:[%s176 + $0x88] sm:$0xff] %v258
        %291 = vst [vmem:[%s176 + $0x90] sm:$0xff] %v259
        %292 = vst [vmem:[%s176 + $0x98] sm:$0xff] %v260
        %293 = vst [vmem:[%s176 + $0xa0] sm:$0xff] %v261
        %294 = vst [vmem:[%s176 + $0xa8] sm:$0xff] %v262
        %295 = vst [vmem:[%s176 + $0xb0] sm:$0xff] %v263
        %296 = vst [vmem:[%s176 + $0xb8] sm:$0xff] %v264
        %297 = vst [vmem:[%s176 + $0xc0] sm:$0xff] %v265
        %298 = vst [vmem:[%s176 + $0xc8] sm:$0xff] %v266
        %299 = vst [vmem:[%s176 + $0xd0] sm:$0xff] %v267
        %300 = vst [vmem:[%s176 + $0xd8] sm:$0xff] %v268
        %301 = vst [vmem:[%s176 + $0xe0] sm:$0xff] %v269
        %302 = vst [vmem:[%s176 + $0xe8] sm:$0xff] %v270
        %303 = vst [vmem:[%s176 + $0xf0] sm:$0xff] %v271
        %304 = vst [vmem:[%s176 + $0xf8] sm:$0xff] %v272
        %s305 = sand.u32 %s75, 1
        %s306 = scalar_lea.sflag [#allocation4], %s305
        %s307 = sand.u32 %s75, 1
        %s308 = smul.addr %s307, 256
        %s309 = scalar_lea.vmem [#allocation7], %s308
        // Predicated region
        $region37: #{tpu_custom_call.1} parent=27 // pred_check
          %p310 = pneg %p85
        $region38: #{tpu_custom_call.1} parent=27 // pred_check_branch
          %312 = sbr.rel (%p310) target = $region40
        $region39: #{tpu_custom_call.1} parent=27 // pred_region
          %s314 = ssub.s32 4096, 4096
          %315 = vsyncadd %s306, %s314
          %s316 = smul.addr %s20, 32
          %s317 = smul.addr %s316, 128
          %s318 = scalar_lea.hbm %s2, %s317
          %s319 = sshll.u32 %s309, 4
          %s320 = int_to_ptr.vmem [resolvable:$true] %s319
          %325 = dma.vmem_to_hbm [thread:$0]  %s320, 4096, %s318, %s306, 512, 512, 32
        $region40: #{tpu_custom_call.1} parent=27 // pred_fallthru
          _
      $region28: #{tpu_custom_call.1} parent=5 // pred_fallthru
        _
      %p326 = scmp.le.s32.totalorder 2, %s15
      // Predicated region
      $region41: #{tpu_custom_call.1} parent=5 // pred_check
        %p327 = pneg %p326
      $region42: #{tpu_custom_call.1} parent=5 // pred_check_branch
        %329 = sbr.rel (%p327) target = $region44
      $region43: #{tpu_custom_call.1} parent=5 // pred_region
        %s330 = ssub.s32 %s15, 2
        // Predicated region
        $region45: #{tpu_custom_call.1} parent=43 // pred_check
          %p331 = pneg %p91
        $region46: #{tpu_custom_call.1} parent=43 // pred_check_branch
          %333 = sbr.rel (%p331) target = $region48
        $region47: #{tpu_custom_call.1} parent=43 // pred_region
          %s334 = sand.u32 %s76, 1
          %s335 = scalar_lea.sflag [#allocation4], %s334
          %s336 = sand.u32 %s76, 1
          %s337 = smul.addr %s336, 256
          %s338 = scalar_lea.vmem [#allocation7], %s337
          %339 = dma.done %s335, 4096
        $region48: #{tpu_custom_call.1} parent=43 // pred_fallthru
          _
      $region44: #{tpu_custom_call.1} parent=5 // pred_fallthru
        _
    $region6: #{tpu_custom_call.1} parent=1 // loop_footer
      %s19 = sadd.s32 1, %s15
    $region7: #{tpu_custom_call.1} parent=1 // loop_footer_branch
      %14 = sbr.rel target = $region3
    $region8: #{tpu_custom_call.1} parent=1 // loop_exit
      _
    %340 = vsyncpa [#allocation3], 1
    %s341 = scalar_lea.sflag [#allocation3], 1
    %342 = vsyncpa %s341, 1
    %343 = vsyncpa [#allocation6], 1
    %344 = vsyncpa [#allocation4], 1
    %s345 = scalar_lea.sflag [#allocation4], 1
    %346 = vsyncpa %s345, 1

</llo_original>
